<compile_context>
chip_gen: v5e
topology: v5e:2x2
jax: 0.10.0
libtpu: 0.0.40
codegen_flags: <defaults>
</compile_context>

<pallas_src>
import math
import functools

import jax
import jax.numpy as jnp
from jax import lax
from jax.experimental import pallas as pl
from jax.experimental.pallas import tpu as pltpu


# ----------------------------- kernels --------------------------------------

def _add_pe_kernel(x_ref, pe_ref, o_ref):
    # x_ref: (TS, B, D), pe_ref: (TS, 1, D) -> broadcast add over batch.
    o_ref[...] = x_ref[...] + pe_ref[...]


def _hash_uniform_u32(s_idx, b_idx, d_idx, seed_u32):
    """Counter-based hash -> uniform uint32 per element (deterministic)."""
    h = (s_idx * jnp.uint32(0x9E3779B1)
         + b_idx * jnp.uint32(0x85EBCA77)
         + d_idx * jnp.uint32(0xC2B2AE3D)
         + seed_u32 * jnp.uint32(0x27D4EB2F))
    # "lowbias32" avalanche finalizer.
    h = h ^ (h >> jnp.uint32(16))
    h = h * jnp.uint32(0x7FEB352D)
    h = h ^ (h >> jnp.uint32(15))
    h = h * jnp.uint32(0x846CA68B)
    h = h ^ (h >> jnp.uint32(16))
    return h


def _add_pe_dropout_kernel(seed_ref, x_ref, pe_ref, o_ref, *, threshold, scale):
    # Training-mode dropout: keep with prob (1-p), scale kept values by 1/(1-p).
    y = x_ref[...] + pe_ref[...]
    ts, _, _ = y.shape
    # Global element coordinates (so the mask is independent of the tiling).
    s_idx = (lax.broadcasted_iota(jnp.int32, y.shape, 0)
             + pl.program_id(0) * ts).astype(jnp.uint32)
    b_idx = lax.broadcasted_iota(jnp.int32, y.shape, 1).astype(jnp.uint32)
    d_idx = lax.broadcasted_iota(jnp.int32, y.shape, 2).astype(jnp.uint32)
    seed_u32 = seed_ref[0].astype(jnp.uint32)
    bits = _hash_uniform_u32(s_idx, b_idx, d_idx, seed_u32)
    keep = bits >= jnp.uint32(threshold)          # integer-domain compare
    o_ref[...] = jnp.where(keep, y * scale, 0.0).astype(o_ref.dtype)


# ----------------------------- helpers --------------------------------------

def _dropout_threshold(p):
    return min(int(round(float(p) * float(1 << 32))), (1 << 32) - 1)


def _pick_block_rows(S, B, D, itemsize, target_bytes=4 * 1024 * 1024):
    """Largest row count per block with block size <= ~4 MiB (fits every gen)."""
    rows = max(1, target_bytes // max(1, B * D * itemsize))
    return int(min(S, rows))


def make_positional_encoding_table(max_len, d_model, dtype=jnp.float32):
    """Deterministic sin/cos table, same math as the PyTorch __init__."""
    position = jnp.arange(max_len, dtype=jnp.float32)[:, None]              # (L, 1)
    div_term = jnp.exp(
        jnp.arange(0, d_model, 2, dtype=jnp.float32) * (-math.log(10000.0) / d_model)
    )                                                                        # (D/2,)
    angles = position * div_term                                             # (L, D/2)
    pe = jnp.zeros((max_len, d_model), jnp.float32)
    pe = pe.at[:, 0::2].set(jnp.sin(angles))
    pe = pe.at[:, 1::2].set(jnp.cos(angles))
    # unsqueeze(0).transpose(0, 1)  ->  (max_len, 1, d_model)
    return pe[:, None, :].astype(dtype)


# ----------------------------- module forward -------------------------------

def positional_encoding_forward(x, pe, *, dropout_ratio=0.0, training=False, seed=0):
    """x: (S, B, D); pe: (max_len, 1, D).  Returns dropout(x + pe[:S])."""
    S, B, D = x.shape
    pe_s = pe[:S]                                   # (S, 1, D)
    itemsize = jnp.dtype(x.dtype).itemsize
    ts = _pick_block_rows(S, B, D, itemsize)        # many rows per grid step
    grid = (pl.cdiv(S, ts),)

    nbytes = x.size * itemsize
    cost = pl.CostEstimate(
        flops=2 * x.size,
        transcendentals=0,
        bytes_accessed=2 * nbytes + pe_s.size * jnp.dtype(pe_s.dtype).itemsize)
    cparams = pltpu.CompilerParams(
        dimension_semantics=("parallel",),          # megacore-shardable on v7x
        vmem_limit_bytes=32 * 1024 * 1024)          # headroom for 4 MiB blocks on v5e

    # TODO(synk): for very small batch (B < 8) the (B, D) vreg slices underuse
    # sublanes; if bandwidth-critical, flatten to (S*B, D) with a pre-broadcast
    # PE slab instead.

    if (not training) or dropout_ratio == 0.0:
        # Inference / p=0: dropout is identity.
        return pl.pallas_call(
            _add_pe_kernel,
            out_shape=jax.ShapeDtypeStruct((S, B, D), x.dtype),
            grid_spec=pltpu.PrefetchScalarGridSpec(
                num_scalar_prefetch=0,
                grid=grid,
                in_specs=[
                    pl.BlockSpec((ts, B, D), lambda s: (s, 0, 0)),
                    pl.BlockSpec((ts, 1, D), lambda s: (s, 0, 0)),
                ],
                out_specs=pl.BlockSpec((ts, B, D), lambda s: (s, 0, 0)),
            ),
            compiler_params=cparams,
            cost_estimate=cost,
        )(x, pe_s)

    # Training-mode dropout inside the kernel (counter-based hash RNG).
    threshold = _dropout_threshold(dropout_ratio)
    scale = 1.0 / (1.0 - float(dropout_ratio))
    kern = functools.partial(_add_pe_dropout_kernel,
                             threshold=threshold, scale=scale)
    seed_arr = jnp.array([seed], dtype=jnp.int32)
    return pl.pallas_call(
        kern,
        out_shape=jax.ShapeDtypeStruct((S, B, D), x.dtype),
        grid_spec=pltpu.PrefetchScalarGridSpec(
            num_scalar_prefetch=1,
            grid=grid,
            in_specs=[
                pl.BlockSpec((ts, B, D), lambda s, seed_ref: (s, 0, 0)),
                pl.BlockSpec((ts, 1, D), lambda s, seed_ref: (s, 0, 0)),
            ],
            out_specs=pl.BlockSpec((ts, B, D), lambda s, seed_ref: (s, 0, 0)),
        ),
        compiler_params=cparams,
        cost_estimate=cost,
    )(seed_arr, x, pe_s)


# ----------------------------- demo / check ---------------------------------

if __name__ == "__main__":
    max_len, d_model, dropout_ratio = 64, 128, 0.1   # D multiple of 128 (lane-dense)
    S, B = 8, 2
    seed = 123

    key = jax.random.PRNGKey(0)
    x = jax.random.normal(key, (S, B, d_model), dtype=jnp.float32)
    pe = make_positional_encoding_table(max_len, d_model)
    y_ref = x + pe[:S]

    # --- inference path (dropout = identity) ---------------------------------
    y_eval = positional_encoding_forward(x, pe, dropout_ratio=dropout_ratio,
                                         training=False)
    y_eval = jax.block_until_ready(y_eval)
    assert y_eval.shape == (S, B, d_model)
    assert jnp.allclose(y_eval, y_ref, atol=1e-6, rtol=1e-6), "eval-mode mismatch"

    # --- training path (dropout applied in-kernel) ----------------------------
    y_train = positional_encoding_forward(x, pe, dropout_ratio=dropout_ratio,
                                          training=True, seed=seed)
    y_train = jax.block_until_ready(y_train)

    # Exact reference: same hash-based mask computed in plain JAX.
    s_idx = jnp.arange(S, dtype=jnp.uint32)[:, None, None]
    b_idx = jnp.arange(B, dtype=jnp.uint32)[None, :, None]
    d_idx = jnp.arange(d_model, dtype=jnp.uint32)[None, None, :]
    bits_ref = _hash_uniform_u32(s_idx, b_idx, d_idx, jnp.uint32(seed))
    keep_ref = bits_ref >= jnp.uint32(_dropout_threshold(dropout_ratio))
    y_train_ref = jnp.where(keep_ref, y_ref / (1.0 - dropout_ratio), 0.0)

    assert jnp.allclose(y_train, y_train_ref, atol=1e-5, rtol=1e-5), \
        "train-mode mismatch"
    drop_frac = float(1.0 - jnp.mean(keep_ref.astype(jnp.float32)))
    assert 0.01 < drop_frac < 0.4, f"implausible drop fraction {drop_frac}"

    print("KERNEL_OK")
</pallas_src>

<mosaic_0001>
module attributes {stable_mosaic.version = 11 : i64} {
  func.func @_add_pe_kernel(%arg0: i32, %arg1: memref<8x2x128xf32, #tpu.memory_space<vmem>>, %arg2: memref<8x1x128xf32, #tpu.memory_space<vmem>>, %arg3: memref<8x2x128xf32, #tpu.memory_space<vmem>>) attributes {dimension_semantics = [#tpu.dimension_semantics<parallel>], iteration_bounds = array<i64: 1>, scalar_prefetch = 0 : i64, scratch_operands = 0 : i64, tpu.core_type = #tpu.core_type<tc>, window_params = [{transform_indices = @transform_0, window_bounds = array<i64: 8, 2, 128>}, {transform_indices = @transform_1, window_bounds = array<i64: 8, 1, 128>}, {transform_indices = @transform_2, window_bounds = array<i64: 8, 2, 128>}]} {
    %c0 = arith.constant 0 : index
    %c0_0 = arith.constant 0 : index
    %c0_1 = arith.constant 0 : index
    %0 = vector.load %arg1[%c0, %c0_0, %c0_1] : memref<8x2x128xf32, #tpu.memory_space<vmem>>, vector<8x2x128xf32>
    %c0_2 = arith.constant 0 : index
    %c0_3 = arith.constant 0 : index
    %c0_4 = arith.constant 0 : index
    %1 = vector.load %arg2[%c0_2, %c0_3, %c0_4] : memref<8x1x128xf32, #tpu.memory_space<vmem>>, vector<8x1x128xf32>
    %2 = vector.broadcast %1 : vector<8x1x128xf32> to vector<8x2x128xf32>
    %3 = arith.addf %0, %2 : vector<8x2x128xf32>
    %c0_5 = arith.constant 0 : index
    %c0_6 = arith.constant 0 : index
    %c0_7 = arith.constant 0 : index
    %4 = vector.load %arg3[%c0_5, %c0_6, %c0_7] : memref<8x2x128xf32, #tpu.memory_space<vmem>>, vector<8x2x128xf32>
    tpu.vector_store %arg3[%c0_5, %c0_6, %c0_7], %3 {strides = array<i32>} : memref<8x2x128xf32, #tpu.memory_space<vmem>>, vector<8x2x128xf32>,
    return
  }
  func.func @transform_0(%arg0: i32) -> (i32, i32, i32) {
    %c0_i32 = arith.constant 0 : i32
    %c0_i32_0 = arith.constant 0 : i32
    %c0_i32_1 = arith.constant 0 : i32
    return %arg0, %c0_i32, %c0_i32_0 : i32, i32, i32
  }
  func.func @transform_1(%arg0: i32) -> (i32, i32, i32) {
    %c0_i32 = arith.constant 0 : i32
    %c0_i32_0 = arith.constant 0 : i32
    %c0_i32_1 = arith.constant 0 : i32
    return %arg0, %c0_i32, %c0_i32_0 : i32, i32, i32
  }
  func.func @transform_2(%arg0: i32) -> (i32, i32, i32) {
    %c0_i32 = arith.constant 0 : i32
    %c0_i32_0 = arith.constant 0 : i32
    %c0_i32_1 = arith.constant 0 : i32
    return %arg0, %c0_i32, %c0_i32_0 : i32, i32, i32
  }
}

</mosaic_0001>

<llo_original>
// kernel: tpu_custom_call.1
$region0: #{tpu_custom_call.1}
  #allocation0 [shape = 'u32[]', space=smem, size = 0x4, offset = 0x4, fixed_abs, tag = 'smem constant byte address 0x4 - core index']
  #allocation1 [shape = 'u32[72,128]{1,0:T(1,128)}', space=vmem, size = 0x9000, scoped, tag = 'internal scratch']
  %s0 = inlined_call_operand.hbm [shape: f32[8,2,128], index: 0, kind: input, shape index: {}]
  %s1 = inlined_call_operand.hbm [shape: f32[8,1,128], index: 1, kind: input, shape index: {}]
  %s2 = inlined_call_operand.hbm [shape: f32[8,2,128], index: 2, kind: output, shape index: {}]
  %s3 = sld [smem:[#allocation0]]
  $region26: #{tpu_custom_call.1} parent=0
    _
  %s5 = ssub.s32 1, %s3
  %s6 = scalar_select 0, %s5, %s3
  $region1: #{tpu_custom_call.1} parent=0
    #allocation2 [shape = 'u8[8192]{0}', space=vmem, size = 0x2000, scoped, tag = 'input window, operand 0, single buffered']
    #allocation3 [shape = 's32[1]{0}', space=sflag, size = 0x4, scoped, tag = 'scoped memory for tpu_custom_call.1']
    #allocation4 [shape = 's32[1]{0}', space=sflag, size = 0x4, scoped, tag = 'scoped memory for tpu_custom_call.1']
    #allocation5 [shape = 'u8[4096]{0}', space=vmem, size = 0x1000, scoped, tag = 'input window, operand 1, single buffered']
    #allocation6 [shape = 's32[1]{0}', space=sflag, size = 0x4, scoped, tag = 'scoped memory for tpu_custom_call.1']
    #allocation7 [shape = 'u8[8192]{0}', space=vmem, size = 0x2000, scoped, tag = 'output window, operand 0, single buffered']
    %7 = vsyncpa [#allocation3], 0
    %8 = vsyncpa [#allocation6], 0
    %9 = vsyncpa [#allocation4], 0
    // Predicated region
    $region2: #{tpu_custom_call.1} parent=1 // pred_check
      _
    $region3: #{tpu_custom_call.1} parent=1 // pred_check_branch
      %11 = sbr.rel (0) target = $region5
    $region4: #{tpu_custom_call.1} parent=1 // pred_region
      %13 = vsyncadd [#allocation3], 0
      %s14 = sshll.u32 %s0, 4
      %s15 = int_to_ptr.hbm [resolvable:$true] %s14
      %s16 = sshll.u32 [#allocation2], 4
      %s17 = int_to_ptr.vmem [resolvable:$true] %s16
      %22 = dma.hbm_to_vmem [thread:$0]  %s15, 256, %s17, [#allocation3], 32, 32, 2
    $region5: #{tpu_custom_call.1} parent=1 // pred_fallthru
      _
    // Predicated region
    $region6: #{tpu_custom_call.1} parent=1 // pred_check
      _
    $region7: #{tpu_custom_call.1} parent=1 // pred_check_branch
      %24 = sbr.rel (0) target = $region9
    $region8: #{tpu_custom_call.1} parent=1 // pred_region
      %26 = vsyncadd [#allocation6], 0
      %s27 = sshll.u32 %s1, 4
      %s28 = int_to_ptr.hbm [resolvable:$true] %s27
      %s29 = sshll.u32 [#allocation5], 4
      %s30 = int_to_ptr.vmem [resolvable:$true] %s29
      %35 = dma.hbm_to_vmem [thread:$0]  %s28, 128, %s30, [#allocation6], 16, 16, 1
    $region9: #{tpu_custom_call.1} parent=1 // pred_fallthru
      _
    // Predicated region
    $region10: #{tpu_custom_call.1} parent=1 // pred_check
      _
    $region11: #{tpu_custom_call.1} parent=1 // pred_check_branch
      %37 = sbr.rel (0) target = $region13
    $region12: #{tpu_custom_call.1} parent=1 // pred_region
      %39 = dma.done [#allocation3], 256
    $region13: #{tpu_custom_call.1} parent=1 // pred_fallthru
      _
    // Predicated region
    $region14: #{tpu_custom_call.1} parent=1 // pred_check
      _
    $region15: #{tpu_custom_call.1} parent=1 // pred_check_branch
      %41 = sbr.rel (0) target = $region17
    $region16: #{tpu_custom_call.1} parent=1 // pred_region
      %43 = dma.done [#allocation6], 128
    $region17: #{tpu_custom_call.1} parent=1 // pred_fallthru
      _
    %v44 = vld [vmem:[#allocation2] sm:$0x3]
    %v45 = vld [vmem:[#allocation2 + $0x2] sm:$0x3]
    %v46 = vld [vmem:[#allocation2 + $0x4] sm:$0x3]
    %v47 = vld [vmem:[#allocation2 + $0x6] sm:$0x3]
    %v48 = vld [vmem:[#allocation2 + $0x8] sm:$0x3]
    %v49 = vld [vmem:[#allocation2 + $0xa] sm:$0x3]
    %v50 = vld [vmem:[#allocation2 + $0xc] sm:$0x3]
    %v51 = vld [vmem:[#allocation2 + $0xe] sm:$0x3]
    %v52 = vld [vmem:[#allocation5] sm:$0x1]
    %v53 = vld [vmem:[#allocation5 + $0x1] sm:$0x1]
    %v54 = vld [vmem:[#allocation5 + $0x2] sm:$0x1]
    %v55 = vld [vmem:[#allocation5 + $0x3] sm:$0x1]
    %v56 = vld [vmem:[#allocation5 + $0x4] sm:$0x1]
    %v57 = vld [vmem:[#allocation5 + $0x5] sm:$0x1]
    %v58 = vld [vmem:[#allocation5 + $0x6] sm:$0x1]
    %v59 = vld [vmem:[#allocation5 + $0x7] sm:$0x1]
    %v68 = vperm.slane %v52, 0
    %v69 = vperm.slane %v53, 0
    %v70 = vperm.slane %v54, 0
    %v71 = vperm.slane %v55, 0
    %v72 = vperm.slane %v56, 0
    %v73 = vperm.slane %v57, 0
    %v74 = vperm.slane %v58, 0
    %v75 = vperm.slane %v59, 0
    %v84 = vadd.f32 %v44, %v68
    %v85 = vadd.f32 %v45, %v69
    %v86 = vadd.f32 %v46, %v70
    %v87 = vadd.f32 %v47, %v71
    %v88 = vadd.f32 %v48, %v72
    %v89 = vadd.f32 %v49, %v73
    %v90 = vadd.f32 %v50, %v74
    %v91 = vadd.f32 %v51, %v75
    %92 = vst [vmem:[#allocation7] sm:$0x3] %v84
    %93 = vst [vmem:[#allocation7 + $0x2] sm:$0x3] %v85
    %94 = vst [vmem:[#allocation7 + $0x4] sm:$0x3] %v86
    %95 = vst [vmem:[#allocation7 + $0x6] sm:$0x3] %v87
    %96 = vst [vmem:[#allocation7 + $0x8] sm:$0x3] %v88
    %97 = vst [vmem:[#allocation7 + $0xa] sm:$0x3] %v89
    %98 = vst [vmem:[#allocation7 + $0xc] sm:$0x3] %v90
    %99 = vst [vmem:[#allocation7 + $0xe] sm:$0x3] %v91
    // Predicated region
    $region18: #{tpu_custom_call.1} parent=1 // pred_check
      _
    $region19: #{tpu_custom_call.1} parent=1 // pred_check_branch
      %101 = sbr.rel (0) target = $region21
    $region20: #{tpu_custom_call.1} parent=1 // pred_region
      %103 = vsyncadd [#allocation4], 0
      %s104 = sshll.u32 [#allocation7], 4
      %s105 = int_to_ptr.vmem [resolvable:$true] %s104
      %s106 = sshll.u32 %s2, 4
      %s107 = int_to_ptr.hbm [resolvable:$true] %s106
      %112 = dma.vmem_to_hbm [thread:$0]  %s105, 256, %s107, [#allocation4], 32, 32, 2
    $region21: #{tpu_custom_call.1} parent=1 // pred_fallthru
      _
    // Predicated region
    $region22: #{tpu_custom_call.1} parent=1 // pred_check
      _
    $region23: #{tpu_custom_call.1} parent=1 // pred_check_branch
      %114 = sbr.rel (0) target = $region25
    $region24: #{tpu_custom_call.1} parent=1 // pred_region
      %116 = dma.done [#allocation4], 256
    $region25: #{tpu_custom_call.1} parent=1 // pred_fallthru
      _
    %117 = vsyncpa [#allocation3], 1
    %118 = vsyncpa [#allocation6], 1
    %119 = vsyncpa [#allocation4], 1

</llo_original>
